<compile_context>
chip_gen: v7x
topology: tpu7x:2x2x1
jax: 0.10.0
libtpu: 0.0.40
codegen_flags: <defaults>
</compile_context>

<pallas_src>
import functools

import jax
import jax.numpy as jnp
from jax import lax
from jax.experimental import pallas as pl
from jax.experimental.pallas import tpu as pltpu


def _round_up(n: int, m: int) -> int:
    return ((n + m - 1) // m) * m


def _lif_kernel(x_ref, w_ref, o_ref, m_ref, xt_ref, *, alpha, threshold):
    """One grid step == one (batch-tile, time-chunk), time-major.

    x_ref : (Tc, Bt, D)   bf16 inputs for this chunk (time-major)
    w_ref : (D, Hp)       bf16 transposed Linear weight (VMEM-resident)
    o_ref : (Tc, Bt, Hp)  bf16 output spikes (time-major)
    m_ref : (Bt, Hp)      f32 membrane state (persists across time chunks)
    xt_ref: (Tc, Bt, Hp)  f32 scratch for the chunk's pre-activations
    """
    tc, bt, d = x_ref.shape
    hp = o_ref.shape[-1]

    # Membrane state carries across time chunks of one batch tile (time is the
    # innermost, sequential "arbitrary" grid axis); reset at the first chunk.
    @pl.when(pl.program_id(1) == 0)
    def _():
        m_ref[...] = jnp.zeros_like(m_ref)

    # xt = x @ W.T for all Tc timesteps at once -> a single MXU matmul (f32 acc).
    x2d = x_ref[...].reshape(tc * bt, d)
    xt_ref[...] = jnp.dot(
        x2d, w_ref[...], preferred_element_type=jnp.float32
    ).reshape(tc, bt, hp)

    # Sequential LIF recurrence: each step touches a full (Bt, Hp) slab.
    # Partial unroll keeps LLO scheduling visibility while bounding vreg
    # live ranges for large Tc.
    def step(t, m):
        v = alpha * m + xt_ref[t]
        spike = v > threshold
        o_ref[t] = spike.astype(o_ref.dtype)
        # m = v*(1-z) + alpha*v*z  ==  where(spike, alpha*v, v)
        return jnp.where(spike, alpha * v, v)

    m_ref[...] = lax.fori_loop(0, tc, step, m_ref[...], unroll=min(8, tc))


def _pick_batch_chunk(b: int, target: int) -> int:
    """8-aligned divisor of b, <= target, preferring >= 2 batch tiles when
    b >= 16 so the 'parallel' batch axis can shard across both v7x TCs."""
    if b % 8 != 0:
        return b
    cap = min(target, b // 2) if b >= 16 else min(target, b)
    cap = max(8, (cap // 8) * 8)
    for cand in range(cap, 7, -8):
        if b % cand == 0:
            return cand
    return 8


def _pallas_forward(x_tm, wt, *, B, T_pad, D, Hp, Bt, Tc, alpha, threshold,
                    single_buffer_weight):
    kernel = functools.partial(_lif_kernel, alpha=float(alpha),
                               threshold=float(threshold))
    grid = (B // Bt, T_pad // Tc)

    if single_buffer_weight:
        # Resident weight: constant index_map -> never re-fetched; single-buffer
        # it to halve its VMEM footprint (matters under v7x's 64 MiB VMEM).
        w_spec = pl.BlockSpec((D, Hp), lambda b, t: (0, 0),
                              pipeline_mode=pl.Buffered(buffer_count=1))
    else:
        w_spec = pl.BlockSpec((D, Hp), lambda b, t: (0, 0))

    # VMEM budget: double-buffered x/out blocks + weight + scratch, with headroom.
    est = (2 * Tc * Bt * D * 2
           + (1 if single_buffer_weight else 2) * D * Hp * 2
           + 2 * Tc * Bt * Hp * 2
           + Bt * Hp * 4
           + Tc * Bt * Hp * 4)
    vmem_limit = int(min(max(3 * est, 32 << 20), 96 << 20))

    return pl.pallas_call(
        kernel,
        out_shape=jax.ShapeDtypeStruct((T_pad, B, Hp), jnp.bfloat16),
        grid_spec=pltpu.PrefetchScalarGridSpec(
            num_scalar_prefetch=0,
            grid=grid,
            in_specs=[
                pl.BlockSpec((Tc, Bt, D), lambda b, t: (t, b, 0)),   # x chunk
                w_spec,                                              # resident W^T
            ],
            out_specs=pl.BlockSpec((Tc, Bt, Hp), lambda b, t: (t, b, 0)),
            scratch_shapes=[
                pltpu.VMEM((Bt, Hp), jnp.float32),       # membrane m
                pltpu.VMEM((Tc, Bt, Hp), jnp.float32),   # chunk pre-activations
            ],
        ),
        compiler_params=pltpu.CompilerParams(
            dimension_semantics=("parallel", "arbitrary"),  # batch ||, time seq
            vmem_limit_bytes=vmem_limit,
        ),
    )(x_tm, wt)


def fast_vector_lif_forward(x_seq, weight, *, alpha=0.9, threshold=1.0,
                            time_chunk=32, batch_chunk=16, out_dtype=None):
    """x_seq: [B, T, D] or [T, D]; weight: [H, D]. Returns spikes [B, T, H] (or [T, H])."""
    squeeze_batch = x_seq.ndim == 2
    if squeeze_batch:
        x_seq = x_seq[None, ...]

    B, T, D = x_seq.shape
    H = weight.shape[0]
    assert weight.shape == (H, D)
    if out_dtype is None:
        out_dtype = x_seq.dtype

    # --- tiling ----------------------------------------------------------
    Tc = min(_round_up(T, 8), _round_up(max(1, time_chunk), 8))   # multiple of 8
    T_pad = _round_up(T, Tc)
    Bt = _pick_batch_chunk(B, batch_chunk)
    Hp = _round_up(H, 128)                                        # lane-dense output

    # --- operand prep: ONE fused transpose + pad + bf16 cast pass over x --
    x_tm = jnp.transpose(x_seq, (1, 0, 2)).astype(jnp.bfloat16)   # [T, B, D]
    if T_pad != T:
        x_tm = jnp.pad(x_tm, ((0, T_pad - T), (0, 0), (0, 0)))

    wt = jnp.transpose(weight, (1, 0)).astype(jnp.bfloat16)       # [D, H]
    if Hp != H:
        wt = jnp.pad(wt, ((0, 0), (0, Hp - H)))                   # padded cols never spike

    kwargs = dict(B=B, T_pad=T_pad, D=D, Hp=Hp, Bt=Bt, Tc=Tc,
                  alpha=alpha, threshold=threshold)
    try:
        out_tm = _pallas_forward(x_tm, wt, single_buffer_weight=True, **kwargs)
    except Exception:
        # Fallback if pipeline_mode=pl.Buffered(1) is unsupported on this build.
        out_tm = _pallas_forward(x_tm, wt, single_buffer_weight=False, **kwargs)

    # Back to [B, T, H] in the requested dtype: single fused transpose+slice+cast.
    out = jnp.transpose(out_tm[:T, :, :H], (1, 0, 2)).astype(out_dtype)
    if squeeze_batch:
        out = out[0]
    return out


def _reference_forward(x_seq, weight, *, alpha=0.9, threshold=1.0):
    """Pure-JAX mirror of the PyTorch loop (f32 throughout)."""
    if x_seq.ndim == 2:
        x_seq = x_seq[None, ...]
    B, T, D = x_seq.shape
    H = weight.shape[0]
    m = jnp.zeros((B, H), jnp.float32)
    outs = []
    for t in range(T):
        xt = x_seq[:, t, :] @ weight.T
        v = alpha * m + xt
        z = (v > threshold).astype(jnp.float32)
        outs.append(z)
        m = v * (1.0 - z) + alpha * v * z
    return jnp.stack(outs, axis=1)


def _quantized_inputs(kx, kw, B, T, D, H):
    """Deterministic inputs quantized to a coarse (bf16-exact) grid so the bf16
    kernel matmul and the f32 reference matmul are exactly equal (hard-threshold
    spikes stay bit-identical regardless of accumulation order/dtype)."""
    x = jax.random.normal(kx, (B, T, D), dtype=jnp.float32)
    x = jnp.round(x * 8.0) / 8.0
    bound = 1.0 / (D ** 0.5)
    w = jax.random.uniform(kw, (H, D), dtype=jnp.float32, minval=-bound, maxval=bound)
    w = jnp.round(w * 64.0) / 64.0
    return x, w


if __name__ == "__main__":
    alpha, threshold = 0.9, 1.0
    k1, k2, k3, k4 = jax.random.split(jax.random.PRNGKey(0), 4)

    # --- test 1: module-like small shapes (single chunk, unpadded time) ---
    B, T, D, H = 2, 8, 32, 32
    x1, w1 = _quantized_inputs(k1, k2, B, T, D, H)
    out1 = jax.block_until_ready(
        fast_vector_lif_forward(x1, w1, alpha=alpha, threshold=threshold))
    ref1 = _reference_forward(x1, w1, alpha=alpha, threshold=threshold)
    assert out1.shape == (B, T, H)
    assert bool(jnp.array_equal(out1.astype(jnp.float32), ref1)), "mismatch (test 1)"

    # --- test 2: exercises 2 batch tiles, 3 time chunks, T & H padding ---
    B, T, D, H = 16, 20, 48, 32
    x2, w2 = _quantized_inputs(k3, k4, B, T, D, H)
    out2 = jax.block_until_ready(
        fast_vector_lif_forward(x2, w2, alpha=alpha, threshold=threshold,
                                time_chunk=8, batch_chunk=16))
    ref2 = _reference_forward(x2, w2, alpha=alpha, threshold=threshold)
    assert out2.shape == (B, T, H)
    assert bool(jnp.array_equal(out2.astype(jnp.float32), ref2)), "mismatch (test 2)"

    print("KERNEL_OK")
</pallas_src>

<mosaic_0001>
module attributes {stable_mosaic.version = 11 : i64} {
  func.func @_lif_kernel(%arg0: i32, %arg1: i32, %arg2: memref<8x2x32xbf16, #tpu.memory_space<vmem>>, %arg3: memref<32x128xbf16, #tpu.memory_space<vmem>>, %arg4: memref<8x2x128xbf16, #tpu.memory_space<vmem>>, %arg5: memref<2x128xf32, #tpu.memory_space<vmem>>, %arg6: memref<8x2x128xf32, #tpu.memory_space<vmem>>) attributes {dimension_semantics = [#tpu.dimension_semantics<parallel>, #tpu.dimension_semantics<arbitrary>], iteration_bounds = array<i64: 1, 1>, scalar_prefetch = 0 : i64, scratch_operands = 2 : i64, tpu.core_type = #tpu.core_type<tc>, window_params = [{transform_indices = @transform_0, window_bounds = array<i64: 8, 2, 32>}, {pipeline_mode = #tpu.pipeline_mode<synchronous>, transform_indices = @transform_1, window_bounds = array<i64: 32, 128>}, {transform_indices = @transform_2, window_bounds = array<i64: 8, 2, 128>}]} {
    %c0_i32 = arith.constant 0 : i32
    %0 = arith.cmpi eq, %arg1, %c0_i32 : i32
    %1 = arith.extui %0 : i1 to i32
    %c0_i32_0 = arith.constant 0 : i32
    %2 = arith.cmpi ne, %1, %c0_i32_0 : i32
    scf.if %2 {
      %cst_69 = arith.constant 0.000000e+00 : f32
      %155 = vector.broadcast %cst_69 : f32 to vector<2x128xf32>
      %c0_70 = arith.constant 0 : index
      %c0_71 = arith.constant 0 : index
      %156 = vector.load %arg5[%c0_70, %c0_71] : memref<2x128xf32, #tpu.memory_space<vmem>>, vector<2x128xf32>
      tpu.vector_store %arg5[%c0_70, %c0_71], %155 {strides = array<i32>} : memref<2x128xf32, #tpu.memory_space<vmem>>, vector<2x128xf32>,
    } else {
    }
    %c0 = arith.constant 0 : index
    %c0_1 = arith.constant 0 : index
    %c0_2 = arith.constant 0 : index
    %3 = vector.load %arg2[%c0, %c0_1, %c0_2] : memref<8x2x32xbf16, #tpu.memory_space<vmem>>, vector<8x2x32xbf16>
    %4 = vector.shape_cast %3 : vector<8x2x32xbf16> to vector<16x32xbf16>
    %c0_3 = arith.constant 0 : index
    %c0_4 = arith.constant 0 : index
    %5 = vector.load %arg3[%c0_3, %c0_4] : memref<32x128xbf16, #tpu.memory_space<vmem>>, vector<32x128xbf16>
    %cst = arith.constant dense<0.000000e+00> : vector<16x128xf32>
    %6 = tpu.matmul %4, %5, %cst {dimension_numbers = #tpu.dot_dimension_numbers<[1], [0], [0], [1], [0, 0, 1, 1], [], []>} : vector<16x32xbf16>, vector<32x128xbf16>, vector<16x128xf32> -> vector<16x128xf32>
    %7 = vector.shape_cast %6 : vector<16x128xf32> to vector<8x2x128xf32>
    %c0_5 = arith.constant 0 : index
    %c0_6 = arith.constant 0 : index
    %c0_7 = arith.constant 0 : index
    %8 = vector.load %arg6[%c0_5, %c0_6, %c0_7] : memref<8x2x128xf32, #tpu.memory_space<vmem>>, vector<8x2x128xf32>
    tpu.vector_store %arg6[%c0_5, %c0_6, %c0_7], %7 {strides = array<i32>} : memref<8x2x128xf32, #tpu.memory_space<vmem>>, vector<8x2x128xf32>,
    %c0_8 = arith.constant 0 : index
    %c0_9 = arith.constant 0 : index
    %9 = vector.load %arg5[%c0_8, %c0_9] : memref<2x128xf32, #tpu.memory_space<vmem>>, vector<2x128xf32>
    %c0_i32_10 = arith.constant 0 : i32
    %cst_11 = arith.constant 0.899999976 : f32
    %10 = vector.broadcast %cst_11 : f32 to vector<2x128xf32>
    %11 = arith.mulf %10, %9 : vector<2x128xf32>
    %12 = arith.index_cast %c0_i32_10 : i32 to index
    %c0_12 = arith.constant 0 : index
    %c0_13 = arith.constant 0 : index
    %13 = vector.load %arg6[%12, %c0_12, %c0_13] : memref<8x2x128xf32, #tpu.memory_space<vmem>>, vector<1x2x128xf32>
    %14 = vector.shape_cast %13 : vector<1x2x128xf32> to vector<2x128xf32>
    %15 = arith.addf %11, %14 : vector<2x128xf32>
    %cst_14 = arith.constant 1.000000e+00 : f32
    %16 = vector.broadcast %cst_14 : f32 to vector<2x128xf32>
    %17 = arith.cmpf ogt, %15, %16 : vector<2x128xf32>
    %18 = arith.extui %17 : vector<2x128xi1> to vector<2x128xi32>
    %19 = arith.sitofp %18 : vector<2x128xi32> to vector<2x128xf32>
    %20 = arith.truncf %19 : vector<2x128xf32> to vector<2x128xbf16>
    %21 = arith.index_cast %c0_i32_10 : i32 to index
    %c0_15 = arith.constant 0 : index
    %c0_16 = arith.constant 0 : index
    %22 = vector.load %arg4[%21, %c0_15, %c0_16] : memref<8x2x128xbf16, #tpu.memory_space<vmem>>, vector<1x2x128xbf16>
    %23 = vector.shape_cast %22 : vector<1x2x128xbf16> to vector<2x128xbf16>
    %24 = vector.shape_cast %20 : vector<2x128xbf16> to vector<1x2x128xbf16>
    tpu.vector_store %arg4[%21, %c0_15, %c0_16], %24 {strides = array<i32>} : memref<8x2x128xbf16, #tpu.memory_space<vmem>>, vector<1x2x128xbf16>,
    %cst_17 = arith.constant 0.899999976 : f32
    %25 = vector.broadcast %cst_17 : f32 to vector<2x128xf32>
    %26 = arith.mulf %25, %15 : vector<2x128xf32>
    %27 = arith.select %17, %26, %15 : vector<2x128xi1>, vector<2x128xf32>
    %c1_i32 = arith.constant 1 : i32
    %cst_18 = arith.constant 0.899999976 : f32
    %28 = vector.broadcast %cst_18 : f32 to vector<2x128xf32>
    %29 = arith.mulf %28, %27 : vector<2x128xf32>
    %30 = arith.index_cast %c1_i32 : i32 to index
    %c0_19 = arith.constant 0 : index
    %c0_20 = arith.constant 0 : index
    %31 = vector.load %arg6[%30, %c0_19, %c0_20] : memref<8x2x128xf32, #tpu.memory_space<vmem>>, vector<1x2x128xf32>
    %32 = vector.shape_cast %31 : vector<1x2x128xf32> to vector<2x128xf32>
    %33 = arith.addf %29, %32 : vector<2x128xf32>
    %cst_21 = arith.constant 1.000000e+00 : f32
    %34 = vector.broadcast %cst_21 : f32 to vector<2x128xf32>
    %35 = arith.cmpf ogt, %33, %34 : vector<2x128xf32>
    %36 = arith.extui %35 : vector<2x128xi1> to vector<2x128xi32>
    %37 = arith.sitofp %36 : vector<2x128xi32> to vector<2x128xf32>
    %38 = arith.truncf %37 : vector<2x128xf32> to vector<2x128xbf16>
    %39 = arith.index_cast %c1_i32 : i32 to index
    %c0_22 = arith.constant 0 : index
    %c0_23 = arith.constant 0 : index
    %40 = vector.load %arg4[%39, %c0_22, %c0_23] : memref<8x2x128xbf16, #tpu.memory_space<vmem>>, vector<1x2x128xbf16>
    %41 = vector.shape_cast %40 : vector<1x2x128xbf16> to vector<2x128xbf16>
    %42 = vector.shape_cast %38 : vector<2x128xbf16> to vector<1x2x128xbf16>
    tpu.vector_store %arg4[%39, %c0_22, %c0_23], %42 {strides = array<i32>} : memref<8x2x128xbf16, #tpu.memory_space<vmem>>, vector<1x2x128xbf16>,
    %cst_24 = arith.constant 0.899999976 : f32
    %43 = vector.broadcast %cst_24 : f32 to vector<2x128xf32>
    %44 = arith.mulf %43, %33 : vector<2x128xf32>
    %45 = arith.select %35, %44, %33 : vector<2x128xi1>, vector<2x128xf32>
    %c2_i32 = arith.constant 2 : i32
    %cst_25 = arith.constant 0.899999976 : f32
    %46 = vector.broadcast %cst_25 : f32 to vector<2x128xf32>
    %47 = arith.mulf %46, %45 : vector<2x128xf32>
    %48 = arith.index_cast %c2_i32 : i32 to index
    %c0_26 = arith.constant 0 : index
    %c0_27 = arith.constant 0 : index
    %49 = vector.load %arg6[%48, %c0_26, %c0_27] : memref<8x2x128xf32, #tpu.memory_space<vmem>>, vector<1x2x128xf32>
    %50 = vector.shape_cast %49 : vector<1x2x128xf32> to vector<2x128xf32>
    %51 = arith.addf %47, %50 : vector<2x128xf32>
    %cst_28 = arith.constant 1.000000e+00 : f32
    %52 = vector.broadcast %cst_28 : f32 to vector<2x128xf32>
    %53 = arith.cmpf ogt, %51, %52 : vector<2x128xf32>
    %54 = arith.extui %53 : vector<2x128xi1> to vector<2x128xi32>
    %55 = arith.sitofp %54 : vector<2x128xi32> to vector<2x128xf32>
    %56 = arith.truncf %55 : vector<2x128xf32> to vector<2x128xbf16>
    %57 = arith.index_cast %c2_i32 : i32 to index
    %c0_29 = arith.constant 0 : index
    %c0_30 = arith.constant 0 : index
    %58 = vector.load %arg4[%57, %c0_29, %c0_30] : memref<8x2x128xbf16, #tpu.memory_space<vmem>>, vector<1x2x128xbf16>
    %59 = vector.shape_cast %58 : vector<1x2x128xbf16> to vector<2x128xbf16>
    %60 = vector.shape_cast %56 : vector<2x128xbf16> to vector<1x2x128xbf16>
    tpu.vector_store %arg4[%57, %c0_29, %c0_30], %60 {strides = array<i32>} : memref<8x2x128xbf16, #tpu.memory_space<vmem>>, vector<1x2x128xbf16>,
    %cst_31 = arith.constant 0.899999976 : f32
    %61 = vector.broadcast %cst_31 : f32 to vector<2x128xf32>
    %62 = arith.mulf %61, %51 : vector<2x128xf32>
    %63 = arith.select %53, %62, %51 : vector<2x128xi1>, vector<2x128xf32>
    %c3_i32 = arith.constant 3 : i32
    %cst_32 = arith.constant 0.899999976 : f32
    %64 = vector.broadcast %cst_32 : f32 to vector<2x128xf32>
    %65 = arith.mulf %64, %63 : vector<2x128xf32>
    %66 = arith.index_cast %c3_i32 : i32 to index
    %c0_33 = arith.constant 0 : index
    %c0_34 = arith.constant 0 : index
    %67 = vector.load %arg6[%66, %c0_33, %c0_34] : memref<8x2x128xf32, #tpu.memory_space<vmem>>, vector<1x2x128xf32>
    %68 = vector.shape_cast %67 : vector<1x2x128xf32> to vector<2x128xf32>
    %69 = arith.addf %65, %68 : vector<2x128xf32>
    %cst_35 = arith.constant 1.000000e+00 : f32
    %70 = vector.broadcast %cst_35 : f32 to vector<2x128xf32>
    %71 = arith.cmpf ogt, %69, %70 : vector<2x128xf32>
    %72 = arith.extui %71 : vector<2x128xi1> to vector<2x128xi32>
    %73 = arith.sitofp %72 : vector<2x128xi32> to vector<2x128xf32>
    %74 = arith.truncf %73 : vector<2x128xf32> to vector<2x128xbf16>
    %75 = arith.index_cast %c3_i32 : i32 to index
    %c0_36 = arith.constant 0 : index
    %c0_37 = arith.constant 0 : index
    %76 = vector.load %arg4[%75, %c0_36, %c0_37] : memref<8x2x128xbf16, #tpu.memory_space<vmem>>, vector<1x2x128xbf16>
    %77 = vector.shape_cast %76 : vector<1x2x128xbf16> to vector<2x128xbf16>
    %78 = vector.shape_cast %74 : vector<2x128xbf16> to vector<1x2x128xbf16>
    tpu.vector_store %arg4[%75, %c0_36, %c0_37], %78 {strides = array<i32>} : memref<8x2x128xbf16, #tpu.memory_space<vmem>>, vector<1x2x128xbf16>,
    %cst_38 = arith.constant 0.899999976 : f32
    %79 = vector.broadcast %cst_38 : f32 to vector<2x128xf32>
    %80 = arith.mulf %79, %69 : vector<2x128xf32>
    %81 = arith.select %71, %80, %69 : vector<2x128xi1>, vector<2x128xf32>
    %c4_i32 = arith.constant 4 : i32
    %cst_39 = arith.constant 0.899999976 : f32
    %82 = vector.broadcast %cst_39 : f32 to vector<2x128xf32>
    %83 = arith.mulf %82, %81 : vector<2x128xf32>
    %84 = arith.index_cast %c4_i32 : i32 to index
    %c0_40 = arith.constant 0 : index
    %c0_41 = arith.constant 0 : index
    %85 = vector.load %arg6[%84, %c0_40, %c0_41] : memref<8x2x128xf32, #tpu.memory_space<vmem>>, vector<1x2x128xf32>
    %86 = vector.shape_cast %85 : vector<1x2x128xf32> to vector<2x128xf32>
    %87 = arith.addf %83, %86 : vector<2x128xf32>
    %cst_42 = arith.constant 1.000000e+00 : f32
    %88 = vector.broadcast %cst_42 : f32 to vector<2x128xf32>
    %89 = arith.cmpf ogt, %87, %88 : vector<2x128xf32>
    %90 = arith.extui %89 : vector<2x128xi1> to vector<2x128xi32>
    %91 = arith.sitofp %90 : vector<2x128xi32> to vector<2x128xf32>
    %92 = arith.truncf %91 : vector<2x128xf32> to vector<2x128xbf16>
    %93 = arith.index_cast %c4_i32 : i32 to index
    %c0_43 = arith.constant 0 : index
    %c0_44 = arith.constant 0 : index
    %94 = vector.load %arg4[%93, %c0_43, %c0_44] : memref<8x2x128xbf16, #tpu.memory_space<vmem>>, vector<1x2x128xbf16>
    %95 = vector.shape_cast %94 : vector<1x2x128xbf16> to vector<2x128xbf16>
    %96 = vector.shape_cast %92 : vector<2x128xbf16> to vector<1x2x128xbf16>
    tpu.vector_store %arg4[%93, %c0_43, %c0_44], %96 {strides = array<i32>} : memref<8x2x128xbf16, #tpu.memory_space<vmem>>, vector<1x2x128xbf16>,
    %cst_45 = arith.constant 0.899999976 : f32
    %97 = vector.broadcast %cst_45 : f32 to vector<2x128xf32>
    %98 = arith.mulf %97, %87 : vector<2x128xf32>
    %99 = arith.select %89, %98, %87 : vector<2x128xi1>, vector<2x128xf32>
    %c5_i32 = arith.constant 5 : i32
    %cst_46 = arith.constant 0.899999976 : f32
    %100 = vector.broadcast %cst_46 : f32 to vector<2x128xf32>
    %101 = arith.mulf %100, %99 : vector<2x128xf32>
    %102 = arith.index_cast %c5_i32 : i32 to index
    %c0_47 = arith.constant 0 : index
    %c0_48 = arith.constant 0 : index
    %103 = vector.load %arg6[%102, %c0_47, %c0_48] : memref<8x2x128xf32, #tpu.memory_space<vmem>>, vector<1x2x128xf32>
    %104 = vector.shape_cast %103 : vector<1x2x128xf32> to vector<2x128xf32>
    %105 = arith.addf %101, %104 : vector<2x128xf32>
    %cst_49 = arith.constant 1.000000e+00 : f32
    %106 = vector.broadcast %cst_49 : f32 to vector<2x128xf32>
    %107 = arith.cmpf ogt, %105, %106 : vector<2x128xf32>
    %108 = arith.extui %107 : vector<2x128xi1> to vector<2x128xi32>
    %109 = arith.sitofp %108 : vector<2x128xi32> to vector<2x128xf32>
    %110 = arith.truncf %109 : vector<2x128xf32> to vector<2x128xbf16>
    %111 = arith.index_cast %c5_i32 : i32 to index
    %c0_50 = arith.constant 0 : index
    %c0_51 = arith.constant 0 : index
    %112 = vector.load %arg4[%111, %c0_50, %c0_51] : memref<8x2x128xbf16, #tpu.memory_space<vmem>>, vector<1x2x128xbf16>
    %113 = vector.shape_cast %112 : vector<1x2x128xbf16> to vector<2x128xbf16>
    %114 = vector.shape_cast %110 : vector<2x128xbf16> to vector<1x2x128xbf16>
    tpu.vector_store %arg4[%111, %c0_50, %c0_51], %114 {strides = array<i32>} : memref<8x2x128xbf16, #tpu.memory_space<vmem>>, vector<1x2x128xbf16>,
    %cst_52 = arith.constant 0.899999976 : f32
    %115 = vector.broadcast %cst_52 : f32 to vector<2x128xf32>
    %116 = arith.mulf %115, %105 : vector<2x128xf32>
    %117 = arith.select %107, %116, %105 : vector<2x128xi1>, vector<2x128xf32>
    %c6_i32 = arith.constant 6 : i32
    %cst_53 = arith.constant 0.899999976 : f32
    %118 = vector.broadcast %cst_53 : f32 to vector<2x128xf32>
    %119 = arith.mulf %118, %117 : vector<2x128xf32>
    %120 = arith.index_cast %c6_i32 : i32 to index
    %c0_54 = arith.constant 0 : index
    %c0_55 = arith.constant 0 : index
    %121 = vector.load %arg6[%120, %c0_54, %c0_55] : memref<8x2x128xf32, #tpu.memory_space<vmem>>, vector<1x2x128xf32>
    %122 = vector.shape_cast %121 : vector<1x2x128xf32> to vector<2x128xf32>
    %123 = arith.addf %119, %122 : vector<2x128xf32>
    %cst_56 = arith.constant 1.000000e+00 : f32
    %124 = vector.broadcast %cst_56 : f32 to vector<2x128xf32>
    %125 = arith.cmpf ogt, %123, %124 : vector<2x128xf32>
    %126 = arith.extui %125 : vector<2x128xi1> to vector<2x128xi32>
    %127 = arith.sitofp %126 : vector<2x128xi32> to vector<2x128xf32>
    %128 = arith.truncf %127 : vector<2x128xf32> to vector<2x128xbf16>
    %129 = arith.index_cast %c6_i32 : i32 to index
    %c0_57 = arith.constant 0 : index
    %c0_58 = arith.constant 0 : index
    %130 = vector.load %arg4[%129, %c0_57, %c0_58] : memref<8x2x128xbf16, #tpu.memory_space<vmem>>, vector<1x2x128xbf16>
    %131 = vector.shape_cast %130 : vector<1x2x128xbf16> to vector<2x128xbf16>
    %132 = vector.shape_cast %128 : vector<2x128xbf16> to vector<1x2x128xbf16>
    tpu.vector_store %arg4[%129, %c0_57, %c0_58], %132 {strides = array<i32>} : memref<8x2x128xbf16, #tpu.memory_space<vmem>>, vector<1x2x128xbf16>,
    %cst_59 = arith.constant 0.899999976 : f32
    %133 = vector.broadcast %cst_59 : f32 to vector<2x128xf32>
    %134 = arith.mulf %133, %123 : vector<2x128xf32>
    %135 = arith.select %125, %134, %123 : vector<2x128xi1>, vector<2x128xf32>
    %c7_i32 = arith.constant 7 : i32
    %cst_60 = arith.constant 0.899999976 : f32
    %136 = vector.broadcast %cst_60 : f32 to vector<2x128xf32>
    %137 = arith.mulf %136, %135 : vector<2x128xf32>
    %138 = arith.index_cast %c7_i32 : i32 to index
    %c0_61 = arith.constant 0 : index
    %c0_62 = arith.constant 0 : index
    %139 = vector.load %arg6[%138, %c0_61, %c0_62] : memref<8x2x128xf32, #tpu.memory_space<vmem>>, vector<1x2x128xf32>
    %140 = vector.shape_cast %139 : vector<1x2x128xf32> to vector<2x128xf32>
    %141 = arith.addf %137, %140 : vector<2x128xf32>
    %cst_63 = arith.constant 1.000000e+00 : f32
    %142 = vector.broadcast %cst_63 : f32 to vector<2x128xf32>
    %143 = arith.cmpf ogt, %141, %142 : vector<2x128xf32>
    %144 = arith.extui %143 : vector<2x128xi1> to vector<2x128xi32>
    %145 = arith.sitofp %144 : vector<2x128xi32> to vector<2x128xf32>
    %146 = arith.truncf %145 : vector<2x128xf32> to vector<2x128xbf16>
    %147 = arith.index_cast %c7_i32 : i32 to index
    %c0_64 = arith.constant 0 : index
    %c0_65 = arith.constant 0 : index
    %148 = vector.load %arg4[%147, %c0_64, %c0_65] : memref<8x2x128xbf16, #tpu.memory_space<vmem>>, vector<1x2x128xbf16>
    %149 = vector.shape_cast %148 : vector<1x2x128xbf16> to vector<2x128xbf16>
    %150 = vector.shape_cast %146 : vector<2x128xbf16> to vector<1x2x128xbf16>
    tpu.vector_store %arg4[%147, %c0_64, %c0_65], %150 {strides = array<i32>} : memref<8x2x128xbf16, #tpu.memory_space<vmem>>, vector<1x2x128xbf16>,
    %cst_66 = arith.constant 0.899999976 : f32
    %151 = vector.broadcast %cst_66 : f32 to vector<2x128xf32>
    %152 = arith.mulf %151, %141 : vector<2x128xf32>
    %153 = arith.select %143, %152, %141 : vector<2x128xi1>, vector<2x128xf32>
    %c8_i32 = arith.constant 8 : i32
    %c0_67 = arith.constant 0 : index
    %c0_68 = arith.constant 0 : index
    %154 = vector.load %arg5[%c0_67, %c0_68] : memref<2x128xf32, #tpu.memory_space<vmem>>, vector<2x128xf32>
    tpu.vector_store %arg5[%c0_67, %c0_68], %153 {strides = array<i32>} : memref<2x128xf32, #tpu.memory_space<vmem>>, vector<2x128xf32>,
    return
  }
  func.func @transform_0(%arg0: i32, %arg1: i32) -> (i32, i32, i32) {
    %c0_i32 = arith.constant 0 : i32
    %c0_i32_0 = arith.constant 0 : i32
    return %arg1, %arg0, %c0_i32 : i32, i32, i32
  }
  func.func @transform_1(%arg0: i32, %arg1: i32) -> (i32, i32) {
    %c0_i32 = arith.constant 0 : i32
    %c0_i32_0 = arith.constant 0 : i32
    %c0_i32_1 = arith.constant 0 : i32
    return %c0_i32, %c0_i32_0 : i32, i32
  }
  func.func @transform_2(%arg0: i32, %arg1: i32) -> (i32, i32, i32) {
    %c0_i32 = arith.constant 0 : i32
    %c0_i32_0 = arith.constant 0 : i32
    return %arg1, %arg0, %c0_i32 : i32, i32, i32
  }
}

module attributes {stable_mosaic.version = 11 : i64} {
  func.func @_lif_kernel(%arg0: i32, %arg1: i32, %arg2: memref<8x2x32xbf16, #tpu.memory_space<vmem>>, %arg3: memref<32x128xbf16, #tpu.memory_space<vmem>>, %arg4: memref<8x2x128xbf16, #tpu.memory_space<vmem>>, %arg5: memref<2x128xf32, #tpu.memory_space<vmem>>, %arg6: memref<8x2x128xf32, #tpu.memory_space<vmem>>) attributes {dimension_semantics = [#tpu.dimension_semantics<parallel>, #tpu.dimension_semantics<arbitrary>], iteration_bounds = array<i64: 1, 1>, scalar_prefetch = 0 : i64, scratch_operands = 2 : i64, tpu.core_type = #tpu.core_type<tc>, window_params = [{transform_indices = @transform_0, window_bounds = array<i64: 8, 2, 32>}, {pipeline_mode = #tpu.pipeline_mode<synchronous>, transform_indices = @transform_1, window_bounds = array<i64: 32, 128>}, {transform_indices = @transform_2, window_bounds = array<i64: 8, 2, 128>}]} {
    %c0_i32 = arith.constant 0 : i32
    %0 = arith.cmpi eq, %arg1, %c0_i32 : i32
    %1 = arith.extui %0 : i1 to i32
    %c0_i32_0 = arith.constant 0 : i32
    %2 = arith.cmpi ne, %1, %c0_i32_0 : i32
    scf.if %2 {
      %cst_69 = arith.constant 0.000000e+00 : f32
      %155 = vector.broadcast %cst_69 : f32 to vector<2x128xf32>
      %c0_70 = arith.constant 0 : index
      %c0_71 = arith.constant 0 : index
      %156 = vector.load %arg5[%c0_70, %c0_71] : memref<2x128xf32, #tpu.memory_space<vmem>>, vector<2x128xf32>
      tpu.vector_store %arg5[%c0_70, %c0_71], %155 {strides = array<i32>} : memref<2x128xf32, #tpu.memory_space<vmem>>, vector<2x128xf32>,
    } else {
    }
    %c0 = arith.constant 0 : index
    %c0_1 = arith.constant 0 : index
    %c0_2 = arith.constant 0 : index
    %3 = vector.load %arg2[%c0, %c0_1, %c0_2] : memref<8x2x32xbf16, #tpu.memory_space<vmem>>, vector<8x2x32xbf16>
    %4 = vector.shape_cast %3 : vector<8x2x32xbf16> to vector<16x32xbf16>
    %c0_3 = arith.constant 0 : index
    %c0_4 = arith.constant 0 : index
    %5 = vector.load %arg3[%c0_3, %c0_4] : memref<32x128xbf16, #tpu.memory_space<vmem>>, vector<32x128xbf16>
    %cst = arith.constant dense<0.000000e+00> : vector<16x128xf32>
    %6 = tpu.matmul %4, %5, %cst {dimension_numbers = #tpu.dot_dimension_numbers<[1], [0], [0], [1], [0, 0, 1, 1], [], []>} : vector<16x32xbf16>, vector<32x128xbf16>, vector<16x128xf32> -> vector<16x128xf32>
    %7 = vector.shape_cast %6 : vector<16x128xf32> to vector<8x2x128xf32>
    %c0_5 = arith.constant 0 : index
    %c0_6 = arith.constant 0 : index
    %c0_7 = arith.constant 0 : index
    %8 = vector.load %arg6[%c0_5, %c0_6, %c0_7] : memref<8x2x128xf32, #tpu.memory_space<vmem>>, vector<8x2x128xf32>
    tpu.vector_store %arg6[%c0_5, %c0_6, %c0_7], %7 {strides = array<i32>} : memref<8x2x128xf32, #tpu.memory_space<vmem>>, vector<8x2x128xf32>,
    %c0_8 = arith.constant 0 : index
    %c0_9 = arith.constant 0 : index
    %9 = vector.load %arg5[%c0_8, %c0_9] : memref<2x128xf32, #tpu.memory_space<vmem>>, vector<2x128xf32>
    %c0_i32_10 = arith.constant 0 : i32
    %cst_11 = arith.constant 0.899999976 : f32
    %10 = vector.broadcast %cst_11 : f32 to vector<2x128xf32>
    %11 = arith.mulf %10, %9 : vector<2x128xf32>
    %12 = arith.index_cast %c0_i32_10 : i32 to index
    %c0_12 = arith.constant 0 : index
    %c0_13 = arith.constant 0 : index
    %13 = vector.load %arg6[%12, %c0_12, %c0_13] : memref<8x2x128xf32, #tpu.memory_space<vmem>>, vector<1x2x128xf32>
    %14 = vector.shape_cast %13 : vector<1x2x128xf32> to vector<2x128xf32>
    %15 = arith.addf %11, %14 : vector<2x128xf32>
    %cst_14 = arith.constant 1.000000e+00 : f32
    %16 = vector.broadcast %cst_14 : f32 to vector<2x128xf32>
    %17 = arith.cmpf ogt, %15, %16 : vector<2x128xf32>
    %18 = arith.extui %17 : vector<2x128xi1> to vector<2x128xi32>
    %19 = arith.sitofp %18 : vector<2x128xi32> to vector<2x128xf32>
    %20 = arith.truncf %19 : vector<2x128xf32> to vector<2x128xbf16>
    %21 = arith.index_cast %c0_i32_10 : i32 to index
    %c0_15 = arith.constant 0 : index
    %c0_16 = arith.constant 0 : index
    %22 = vector.load %arg4[%21, %c0_15, %c0_16] : memref<8x2x128xbf16, #tpu.memory_space<vmem>>, vector<1x2x128xbf16>
    %23 = vector.shape_cast %22 : vector<1x2x128xbf16> to vector<2x128xbf16>
    %24 = vector.shape_cast %20 : vector<2x128xbf16> to vector<1x2x128xbf16>
    tpu.vector_store %arg4[%21, %c0_15, %c0_16], %24 {strides = array<i32>} : memref<8x2x128xbf16, #tpu.memory_space<vmem>>, vector<1x2x128xbf16>,
    %cst_17 = arith.constant 0.899999976 : f32
    %25 = vector.broadcast %cst_17 : f32 to vector<2x128xf32>
    %26 = arith.mulf %25, %15 : vector<2x128xf32>
    %27 = arith.select %17, %26, %15 : vector<2x128xi1>, vector<2x128xf32>
    %c1_i32 = arith.constant 1 : i32
    %cst_18 = arith.constant 0.899999976 : f32
    %28 = vector.broadcast %cst_18 : f32 to vector<2x128xf32>
    %29 = arith.mulf %28, %27 : vector<2x128xf32>
    %30 = arith.index_cast %c1_i32 : i32 to index
    %c0_19 = arith.constant 0 : index
    %c0_20 = arith.constant 0 : index
    %31 = vector.load %arg6[%30, %c0_19, %c0_20] : memref<8x2x128xf32, #tpu.memory_space<vmem>>, vector<1x2x128xf32>
    %32 = vector.shape_cast %31 : vector<1x2x128xf32> to vector<2x128xf32>
    %33 = arith.addf %29, %32 : vector<2x128xf32>
    %cst_21 = arith.constant 1.000000e+00 : f32
    %34 = vector.broadcast %cst_21 : f32 to vector<2x128xf32>
    %35 = arith.cmpf ogt, %33, %34 : vector<2x128xf32>
    %36 = arith.extui %35 : vector<2x128xi1> to vector<2x128xi32>
    %37 = arith.sitofp %36 : vector<2x128xi32> to vector<2x128xf32>
    %38 = arith.truncf %37 : vector<2x128xf32> to vector<2x128xbf16>
    %39 = arith.index_cast %c1_i32 : i32 to index
    %c0_22 = arith.constant 0 : index
    %c0_23 = arith.constant 0 : index
    %40 = vector.load %arg4[%39, %c0_22, %c0_23] : memref<8x2x128xbf16, #tpu.memory_space<vmem>>, vector<1x2x128xbf16>
    %41 = vector.shape_cast %40 : vector<1x2x128xbf16> to vector<2x128xbf16>
    %42 = vector.shape_cast %38 : vector<2x128xbf16> to vector<1x2x128xbf16>
    tpu.vector_store %arg4[%39, %c0_22, %c0_23], %42 {strides = array<i32>} : memref<8x2x128xbf16, #tpu.memory_space<vmem>>, vector<1x2x128xbf16>,
    %cst_24 = arith.constant 0.899999976 : f32
    %43 = vector.broadcast %cst_24 : f32 to vector<2x128xf32>
    %44 = arith.mulf %43, %33 : vector<2x128xf32>
    %45 = arith.select %35, %44, %33 : vector<2x128xi1>, vector<2x128xf32>
    %c2_i32 = arith.constant 2 : i32
    %cst_25 = arith.constant 0.899999976 : f32
    %46 = vector.broadcast %cst_25 : f32 to vector<2x128xf32>
    %47 = arith.mulf %46, %45 : vector<2x128xf32>
    %48 = arith.index_cast %c2_i32 : i32 to index
    %c0_26 = arith.constant 0 : index
    %c0_27 = arith.constant 0 : index
    %49 = vector.load %arg6[%48, %c0_26, %c0_27] : memref<8x2x128xf32, #tpu.memory_space<vmem>>, vector<1x2x128xf32>
    %50 = vector.shape_cast %49 : vector<1x2x128xf32> to vector<2x128xf32>
    %51 = arith.addf %47, %50 : vector<2x128xf32>
    %cst_28 = arith.constant 1.000000e+00 : f32
    %52 = vector.broadcast %cst_28 : f32 to vector<2x128xf32>
    %53 = arith.cmpf ogt, %51, %52 : vector<2x128xf32>
    %54 = arith.extui %53 : vector<2x128xi1> to vector<2x128xi32>
    %55 = arith.sitofp %54 : vector<2x128xi32> to vector<2x128xf32>
    %56 = arith.truncf %55 : vector<2x128xf32> to vector<2x128xbf16>
    %57 = arith.index_cast %c2_i32 : i32 to index
    %c0_29 = arith.constant 0 : index
    %c0_30 = arith.constant 0 : index
    %58 = vector.load %arg4[%57, %c0_29, %c0_30] : memref<8x2x128xbf16, #tpu.memory_space<vmem>>, vector<1x2x128xbf16>
    %59 = vector.shape_cast %58 : vector<1x2x128xbf16> to vector<2x128xbf16>
    %60 = vector.shape_cast %56 : vector<2x128xbf16> to vector<1x2x128xbf16>
    tpu.vector_store %arg4[%57, %c0_29, %c0_30], %60 {strides = array<i32>} : memref<8x2x128xbf16, #tpu.memory_space<vmem>>, vector<1x2x128xbf16>,
    %cst_31 = arith.constant 0.899999976 : f32
    %61 = vector.broadcast %cst_31 : f32 to vector<2x128xf32>
    %62 = arith.mulf %61, %51 : vector<2x128xf32>
    %63 = arith.select %53, %62, %51 : vector<2x128xi1>, vector<2x128xf32>
    %c3_i32 = arith.constant 3 : i32
    %cst_32 = arith.constant 0.899999976 : f32
    %64 = vector.broadcast %cst_32 : f32 to vector<2x128xf32>
    %65 = arith.mulf %64, %63 : vector<2x128xf32>
    %66 = arith.index_cast %c3_i32 : i32 to index
    %c0_33 = arith.constant 0 : index
    %c0_34 = arith.constant 0 : index
    %67 = vector.load %arg6[%66, %c0_33, %c0_34] : memref<8x2x128xf32, #tpu.memory_space<vmem>>, vector<1x2x128xf32>
    %68 = vector.shape_cast %67 : vector<1x2x128xf32> to vector<2x128xf32>
    %69 = arith.addf %65, %68 : vector<2x128xf32>
    %cst_35 = arith.constant 1.000000e+00 : f32
    %70 = vector.broadcast %cst_35 : f32 to vector<2x128xf32>
    %71 = arith.cmpf ogt, %69, %70 : vector<2x128xf32>
    %72 = arith.extui %71 : vector<2x128xi1> to vector<2x128xi32>
    %73 = arith.sitofp %72 : vector<2x128xi32> to vector<2x128xf32>
    %74 = arith.truncf %73 : vector<2x128xf32> to vector<2x128xbf16>
    %75 = arith.index_cast %c3_i32 : i32 to index
    %c0_36 = arith.constant 0 : index
    %c0_37 = arith.constant 0 : index
    %76 = vector.load %arg4[%75, %c0_36, %c0_37] : memref<8x2x128xbf16, #tpu.memory_space<vmem>>, vector<1x2x128xbf16>
    %77 = vector.shape_cast %76 : vector<1x2x128xbf16> to vector<2x128xbf16>
    %78 = vector.shape_cast %74 : vector<2x128xbf16> to vector<1x2x128xbf16>
    tpu.vector_store %arg4[%75, %c0_36, %c0_37], %78 {strides = array<i32>} : memref<8x2x128xbf16, #tpu.memory_space<vmem>>, vector<1x2x128xbf16>,
    %cst_38 = arith.constant 0.899999976 : f32
    %79 = vector.broadcast %cst_38 : f32 to vector<2x128xf32>
    %80 = arith.mulf %79, %69 : vector<2x128xf32>
    %81 = arith.select %71, %80, %69 : vector<2x128xi1>, vector<2x128xf32>
    %c4_i32 = arith.constant 4 : i32
    %cst_39 = arith.constant 0.899999976 : f32
    %82 = vector.broadcast %cst_39 : f32 to vector<2x128xf32>
    %83 = arith.mulf %82, %81 : vector<2x128xf32>
    %84 = arith.index_cast %c4_i32 : i32 to index
    %c0_40 = arith.constant 0 : index
    %c0_41 = arith.constant 0 : index
    %85 = vector.load %arg6[%84, %c0_40, %c0_41] : memref<8x2x128xf32, #tpu.memory_space<vmem>>, vector<1x2x128xf32>
    %86 = vector.shape_cast %85 : vector<1x2x128xf32> to vector<2x128xf32>
    %87 = arith.addf %83, %86 : vector<2x128xf32>
    %cst_42 = arith.constant 1.000000e+00 : f32
    %88 = vector.broadcast %cst_42 : f32 to vector<2x128xf32>
    %89 = arith.cmpf ogt, %87, %88 : vector<2x128xf32>
    %90 = arith.extui %89 : vector<2x128xi1> to vector<2x128xi32>
    %91 = arith.sitofp %90 : vector<2x128xi32> to vector<2x128xf32>
    %92 = arith.truncf %91 : vector<2x128xf32> to vector<2x128xbf16>
    %93 = arith.index_cast %c4_i32 : i32 to index
    %c0_43 = arith.constant 0 : index
    %c0_44 = arith.constant 0 : index
    %94 = vector.load %arg4[%93, %c0_43, %c0_44] : memref<8x2x128xbf16, #tpu.memory_space<vmem>>, vector<1x2x128xbf16>
    %95 = vector.shape_cast %94 : vector<1x2x128xbf16> to vector<2x128xbf16>
    %96 = vector.shape_cast %92 : vector<2x128xbf16> to vector<1x2x128xbf16>
    tpu.vector_store %arg4[%93, %c0_43, %c0_44], %96 {strides = array<i32>} : memref<8x2x128xbf16, #tpu.memory_space<vmem>>, vector<1x2x128xbf16>,
    %cst_45 = arith.constant 0.899999976 : f32
    %97 = vector.broadcast %cst_45 : f32 to vector<2x128xf32>
    %98 = arith.mulf %97, %87 : vector<2x128xf32>
    %99 = arith.select %89, %98, %87 : vector<2x128xi1>, vector<2x128xf32>
    %c5_i32 = arith.constant 5 : i32
    %cst_46 = arith.constant 0.899999976 : f32
    %100 = vector.broadcast %cst_46 : f32 to vector<2x128xf32>
    %101 = arith.mulf %100, %99 : vector<2x128xf32>
    %102 = arith.index_cast %c5_i32 : i32 to index
    %c0_47 = arith.constant 0 : index
    %c0_48 = arith.constant 0 : index
    %103 = vector.load %arg6[%102, %c0_47, %c0_48] : memref<8x2x128xf32, #tpu.memory_space<vmem>>, vector<1x2x128xf32>
    %104 = vector.shape_cast %103 : vector<1x2x128xf32> to vector<2x128xf32>
    %105 = arith.addf %101, %104 : vector<2x128xf32>
    %cst_49 = arith.constant 1.000000e+00 : f32
    %106 = vector.broadcast %cst_49 : f32 to vector<2x128xf32>
    %107 = arith.cmpf ogt, %105, %106 : vector<2x128xf32>
    %108 = arith.extui %107 : vector<2x128xi1> to vector<2x128xi32>
    %109 = arith.sitofp %108 : vector<2x128xi32> to vector<2x128xf32>
    %110 = arith.truncf %109 : vector<2x128xf32> to vector<2x128xbf16>
    %111 = arith.index_cast %c5_i32 : i32 to index
    %c0_50 = arith.constant 0 : index
    %c0_51 = arith.constant 0 : index
    %112 = vector.load %arg4[%111, %c0_50, %c0_51] : memref<8x2x128xbf16, #tpu.memory_space<vmem>>, vector<1x2x128xbf16>
    %113 = vector.shape_cast %112 : vector<1x2x128xbf16> to vector<2x128xbf16>
    %114 = vector.shape_cast %110 : vector<2x128xbf16> to vector<1x2x128xbf16>
    tpu.vector_store %arg4[%111, %c0_50, %c0_51], %114 {strides = array<i32>} : memref<8x2x128xbf16, #tpu.memory_space<vmem>>, vector<1x2x128xbf16>,
    %cst_52 = arith.constant 0.899999976 : f32
    %115 = vector.broadcast %cst_52 : f32 to vector<2x128xf32>
    %116 = arith.mulf %115, %105 : vector<2x128xf32>
    %117 = arith.select %107, %116, %105 : vector<2x128xi1>, vector<2x128xf32>
    %c6_i32 = arith.constant 6 : i32
    %cst_53 = arith.constant 0.899999976 : f32
    %118 = vector.broadcast %cst_53 : f32 to vector<2x128xf32>
    %119 = arith.mulf %118, %117 : vector<2x128xf32>
    %120 = arith.index_cast %c6_i32 : i32 to index
    %c0_54 = arith.constant 0 : index
    %c0_55 = arith.constant 0 : index
    %121 = vector.load %arg6[%120, %c0_54, %c0_55] : memref<8x2x128xf32, #tpu.memory_space<vmem>>, vector<1x2x128xf32>
    %122 = vector.shape_cast %121 : vector<1x2x128xf32> to vector<2x128xf32>
    %123 = arith.addf %119, %122 : vector<2x128xf32>
    %cst_56 = arith.constant 1.000000e+00 : f32
    %124 = vector.broadcast %cst_56 : f32 to vector<2x128xf32>
    %125 = arith.cmpf ogt, %123, %124 : vector<2x128xf32>
    %126 = arith.extui %125 : vector<2x128xi1> to vector<2x128xi32>
    %127 = arith.sitofp %126 : vector<2x128xi32> to vector<2x128xf32>
    %128 = arith.truncf %127 : vector<2x128xf32> to vector<2x128xbf16>
    %129 = arith.index_cast %c6_i32 : i32 to index
    %c0_57 = arith.constant 0 : index
    %c0_58 = arith.constant 0 : index
    %130 = vector.load %arg4[%129, %c0_57, %c0_58] : memref<8x2x128xbf16, #tpu.memory_space<vmem>>, vector<1x2x128xbf16>
    %131 = vector.shape_cast %130 : vector<1x2x128xbf16> to vector<2x128xbf16>
    %132 = vector.shape_cast %128 : vector<2x128xbf16> to vector<1x2x128xbf16>
    tpu.vector_store %arg4[%129, %c0_57, %c0_58], %132 {strides = array<i32>} : memref<8x2x128xbf16, #tpu.memory_space<vmem>>, vector<1x2x128xbf16>,
    %cst_59 = arith.constant 0.899999976 : f32
    %133 = vector.broadcast %cst_59 : f32 to vector<2x128xf32>
    %134 = arith.mulf %133, %123 : vector<2x128xf32>
    %135 = arith.select %125, %134, %123 : vector<2x128xi1>, vector<2x128xf32>
    %c7_i32 = arith.constant 7 : i32
    %cst_60 = arith.constant 0.899999976 : f32
    %136 = vector.broadcast %cst_60 : f32 to vector<2x128xf32>
    %137 = arith.mulf %136, %135 : vector<2x128xf32>
    %138 = arith.index_cast %c7_i32 : i32 to index
    %c0_61 = arith.constant 0 : index
    %c0_62 = arith.constant 0 : index
    %139 = vector.load %arg6[%138, %c0_61, %c0_62] : memref<8x2x128xf32, #tpu.memory_space<vmem>>, vector<1x2x128xf32>
    %140 = vector.shape_cast %139 : vector<1x2x128xf32> to vector<2x128xf32>
    %141 = arith.addf %137, %140 : vector<2x128xf32>
    %cst_63 = arith.constant 1.000000e+00 : f32
    %142 = vector.broadcast %cst_63 : f32 to vector<2x128xf32>
    %143 = arith.cmpf ogt, %141, %142 : vector<2x128xf32>
    %144 = arith.extui %143 : vector<2x128xi1> to vector<2x128xi32>
    %145 = arith.sitofp %144 : vector<2x128xi32> to vector<2x128xf32>
    %146 = arith.truncf %145 : vector<2x128xf32> to vector<2x128xbf16>
    %147 = arith.index_cast %c7_i32 : i32 to index
    %c0_64 = arith.constant 0 : index
    %c0_65 = arith.constant 0 : index
    %148 = vector.load %arg4[%147, %c0_64, %c0_65] : memref<8x2x128xbf16, #tpu.memory_space<vmem>>, vector<1x2x128xbf16>
    %149 = vector.shape_cast %148 : vector<1x2x128xbf16> to vector<2x128xbf16>
    %150 = vector.shape_cast %146 : vector<2x128xbf16> to vector<1x2x128xbf16>
    tpu.vector_store %arg4[%147, %c0_64, %c0_65], %150 {strides = array<i32>} : memref<8x2x128xbf16, #tpu.memory_space<vmem>>, vector<1x2x128xbf16>,
    %cst_66 = arith.constant 0.899999976 : f32
    %151 = vector.broadcast %cst_66 : f32 to vector<2x128xf32>
    %152 = arith.mulf %151, %141 : vector<2x128xf32>
    %153 = arith.select %143, %152, %141 : vector<2x128xi1>, vector<2x128xf32>
    %c8_i32 = arith.constant 8 : i32
    %c0_67 = arith.constant 0 : index
    %c0_68 = arith.constant 0 : index
    %154 = vector.load %arg5[%c0_67, %c0_68] : memref<2x128xf32, #tpu.memory_space<vmem>>, vector<2x128xf32>
    tpu.vector_store %arg5[%c0_67, %c0_68], %153 {strides = array<i32>} : memref<2x128xf32, #tpu.memory_space<vmem>>, vector<2x128xf32>,
    return
  }
  func.func @transform_0(%arg0: i32, %arg1: i32) -> (i32, i32, i32) {
    %c0_i32 = arith.constant 0 : i32
    %c0_i32_0 = arith.constant 0 : i32
    return %arg1, %arg0, %c0_i32 : i32, i32, i32
  }
  func.func @transform_1(%arg0: i32, %arg1: i32) -> (i32, i32) {
    %c0_i32 = arith.constant 0 : i32
    %c0_i32_0 = arith.constant 0 : i32
    %c0_i32_1 = arith.constant 0 : i32
    return %c0_i32, %c0_i32_0 : i32, i32
  }
  func.func @transform_2(%arg0: i32, %arg1: i32) -> (i32, i32, i32) {
    %c0_i32 = arith.constant 0 : i32
    %c0_i32_0 = arith.constant 0 : i32
    return %arg1, %arg0, %c0_i32 : i32, i32, i32
  }
}

</mosaic_0001>

<llo_original>
// kernel: tpu_custom_call.1
$region0: #{tpu_custom_call.1}
  #allocation0 [shape = 'u32[]', space=smem, size = 0x4, offset = 0x4, fixed_abs, tag = 'smem constant byte address 0x4 - core index']
  #allocation1 [shape = 'u32[144,128]{1,0:T(1,128)}', space=vmem, size = 0x12000, scoped, tag = 'internal scratch']
  #allocation2 [shape = 'f32[2,128]{1,0:T(2,128)}', space=vmem, size = 0x400, scoped, tag = 'scratch operand']
  #allocation3 [shape = 'f32[8,2,128]{2,1,0:T(2,128)}', space=vmem, size = 0x2000, scoped, tag = 'scratch operand']
  %s0 = inlined_call_operand.hbm [shape: bf16[8,2,32], index: 0, kind: input, shape index: {}]
  %s1 = inlined_call_operand.hbm [shape: bf16[32,128], index: 1, kind: input, shape index: {}]
  %s2 = inlined_call_operand.hbm [shape: bf16[8,2,128], index: 2, kind: output, shape index: {}]
  %s3 = sld [smem:[#allocation0]]
  $region30: #{tpu_custom_call.1} parent=0
    _
  %s5 = ssub.s32 1, %s3
  %s6 = scalar_select 0, %s5, %s3
  $region1: #{tpu_custom_call.1} parent=0
    #allocation4 [shape = 'u8[4096]{0}', space=vmem, size = 0x1000, scoped, tag = 'input window, operand 0, single buffered']
    #allocation5 [shape = 's32[1]{0}', space=sflag, size = 0x4, scoped, tag = 'scoped memory for tpu_custom_call.1']
    #allocation6 [shape = 's32[1]{0}', space=sflag, size = 0x4, scoped, tag = 'scoped memory for tpu_custom_call.1']
    #allocation7 [shape = 'u8[8192]{0}', space=vmem, size = 0x2000, scoped, tag = 'input window, operand 1, single buffered']
    #allocation8 [shape = 's32[1]{0}', space=sflag, size = 0x4, scoped, tag = 'scoped memory for tpu_custom_call.1']
    #allocation9 [shape = 'u8[4096]{0}', space=vmem, size = 0x1000, scoped, tag = 'output window, operand 0, single buffered']
    %7 = vsyncpa [#allocation5], 0
    %8 = vsyncpa [#allocation8], 0
    %9 = vsyncpa [#allocation6], 0
    // Predicated region
    $region2: #{tpu_custom_call.1} parent=1 // pred_check
      _
    $region3: #{tpu_custom_call.1} parent=1 // pred_check_branch
      %11 = sbr.rel (0) target = $region5
    $region4: #{tpu_custom_call.1} parent=1 // pred_region
      %s13 = ssub.s32 128, 128
      %14 = vsyncadd [#allocation5], %s13
      %s15 = sshll.u32 [#allocation4], 4
      %s16 = int_to_ptr.vmem [resolvable:$true] %s15
      %21 = dma.hbm_to_vmem [thread:$0]  %s0, 128, %s16, [#allocation5], 16, 16, 1
    $region5: #{tpu_custom_call.1} parent=1 // pred_fallthru
      _
    // Predicated region
    $region6: #{tpu_custom_call.1} parent=1 // pred_check
      _
    $region7: #{tpu_custom_call.1} parent=1 // pred_check_branch
      %23 = sbr.rel (0) target = $region9
    $region8: #{tpu_custom_call.1} parent=1 // pred_region
      %s25 = ssub.s32 256, 256
      %26 = vsyncadd [#allocation8], %s25
      %s27 = sshll.u32 [#allocation7], 4
      %s28 = int_to_ptr.vmem [resolvable:$true] %s27
      %33 = dma.hbm_to_vmem [thread:$0]  %s1, 256, %s28, [#allocation8], 64, 64, 4
    $region9: #{tpu_custom_call.1} parent=1 // pred_fallthru
      _
    // Predicated region
    $region10: #{tpu_custom_call.1} parent=1 // pred_check
      _
    $region11: #{tpu_custom_call.1} parent=1 // pred_check_branch
      %35 = sbr.rel (0) target = $region13
    $region12: #{tpu_custom_call.1} parent=1 // pred_region
      %36 = dma.done [#allocation5], 128
    $region13: #{tpu_custom_call.1} parent=1 // pred_fallthru
      _
    // Predicated region
    $region14: #{tpu_custom_call.1} parent=1 // pred_check
      _
    $region15: #{tpu_custom_call.1} parent=1 // pred_check_branch
      %38 = sbr.rel (0) target = $region17
    $region16: #{tpu_custom_call.1} parent=1 // pred_region
      %39 = dma.done [#allocation8], 256
    $region17: #{tpu_custom_call.1} parent=1 // pred_fallthru
      _
    %p41 = scmp.eq.s32.totalorder 0, 0
    // Predicated region
    $region18: #{tpu_custom_call.1} parent=1 // pred_check
      %p42 = pneg %p41
    $region19: #{tpu_custom_call.1} parent=1 // pred_check_branch
      %44 = sbr.rel (%p42) target = $region21
    $region20: #{tpu_custom_call.1} parent=1 // pred_region
      %45 = vst [vmem:[#allocation2] sm:$0x3] 0.0
    $region21: #{tpu_custom_call.1} parent=1 // pred_fallthru
      _
    %v46 = vld [vmem:[#allocation4] sm:$0x1]
    %v47 = vld [vmem:[#allocation4 + $0x1] sm:$0x1]
    %v48 = vld [vmem:[#allocation4 + $0x2] sm:$0x1]
    %v49 = vld [vmem:[#allocation4 + $0x3] sm:$0x1]
    %v50 = vld [vmem:[#allocation4 + $0x4] sm:$0x1]
    %v51 = vld [vmem:[#allocation4 + $0x5] sm:$0x1]
    %v52 = vld [vmem:[#allocation4 + $0x6] sm:$0x1]
    %v53 = vld [vmem:[#allocation4 + $0x7] sm:$0x1]
    %v54 = vld [vmem:[#allocation7] sm:$0xf]
    %v55 = vld [vmem:[#allocation7 + $0x4] sm:$0xf]
    %v56 = vld [vmem:[#allocation7 + $0x8] sm:$0xf]
    %v57 = vld [vmem:[#allocation7 + $0xc] sm:$0xf]
    %v66 = vcombine.low %v46, %v47
    %v67 = vcombine.low %v48, %v49
    %v68 = vcombine.low %v50, %v51
    %v69 = vcombine.low %v52, %v53
    %v71 = vunpack.c.l.s4 1966171168
    %v72 = vunpack.c.0.s8 %v71
    %v73 = vlaneseq
    %v74 = vshrl.u32 %v73, 7
    %v75 = vsub.s32 %v72, %v74
    %v76 = vrot.slane %v66, %v75
    %v78 = vunpack.c.l.s4 1966171168
    %v79 = vunpack.c.0.s8 %v78
    %v80 = vlaneseq
    %v81 = vshrl.u32 %v80, 7
    %v82 = vsub.s32 %v79, %v81
    %v83 = vrot.slane %v67, %v82
    %v85 = vunpack.c.l.s4 1966171168
    %v86 = vunpack.c.0.s8 %v85
    %v87 = vlaneseq
    %v88 = vshrl.u32 %v87, 7
    %v89 = vsub.s32 %v86, %v88
    %v90 = vrot.slane %v68, %v89
    %v92 = vunpack.c.l.s4 1966171168
    %v93 = vunpack.c.0.s8 %v92
    %v94 = vlaneseq
    %v95 = vshrl.u32 %v94, 7
    %v96 = vsub.s32 %v93, %v95
    %v97 = vrot.slane %v69, %v96
    %v98 = vcombine.low %v76, %v83
    %v99 = vcombine.low %v90, %v97
    %v101 = vunpack.c.l.s4 1966171168
    %v102 = vunpack.c.0.s8 %v101
    %v103 = vlaneseq
    %v104 = vshrl.u32 %v103, 7
    %v105 = vsub.s32 %v102, %v104
    %v106 = vrot.slane %v98, %v105
    %v108 = vunpack.c.l.s4 1966171168
    %v109 = vunpack.c.0.s8 %v108
    %v110 = vlaneseq
    %v111 = vshrl.u32 %v110, 7
    %v112 = vsub.s32 %v109, %v111
    %v113 = vrot.slane %v99, %v112
    %v114 = vcombine.low %v106, %v113
    %v119 = vunpack.c.l.b16 %v54
    %v120 = vunpack.c.l.b16 %v55
    %v121 = vunpack.c.l.b16 %v56
    %v122 = vunpack.c.l.b16 %v57
    %v123 = vpack.c.b16 %v120, %v119
    %v124 = vpack.c.b16 %v122, %v121
    %vm127 = vcmask 261120
    %v129 = vsel %vm127, %v114, 0
    %131 = vmatprep.subr.bf16.mxu0 0
    %132 = vmatpush1.bf16.msra.mxu0 %v123
    %133 = vmatprep.subr.bf16.mxu0 0
    %134 = vmatpush1.bf16.msra.mxu0 %v124
    %135 = vmatprep.subr.bf16.mxu0 0
    %136 = vmatpush1.bf16.msra.mxu0 0
    %137 = vmatprep.subr.bf16.mxu0 0
    %138 = vmatpush1.bf16.msra.mxu0 0
    %139 = vmatprep.subr.bf16.mxu0 0
    %140 = vmatpush1.bf16.msra.mxu0 0
    %141 = vmatprep.subr.bf16.mxu0 0
    %142 = vmatpush1.bf16.msra.mxu0 0
    %143 = vmatprep.subr.bf16.mxu0 0
    %144 = vmatpush1.bf16.msra.mxu0 0
    %145 = vmatprep.subr.bf16.mxu0 0
    %146 = vmatpush1.bf16.msra.mxu0 0
    %147 = vmatprep.subr.bf16.mxu0 0
    %148 = vmatpush1.bf16.msra.mxu0 0
    %149 = vmatprep.subr.bf16.mxu0 0
    %150 = vmatpush1.bf16.msra.mxu0 0
    %151 = vmatprep.subr.bf16.mxu0 0
    %152 = vmatpush1.bf16.msra.mxu0 0
    %153 = vmatprep.subr.bf16.mxu0 0
    %154 = vmatpush1.bf16.msra.mxu0 0
    %155 = vmatprep.subr.bf16.mxu0 0
    %156 = vmatpush1.bf16.msra.mxu0 0
    %157 = vmatprep.subr.bf16.mxu0 0
    %158 = vmatpush1.bf16.msra.mxu0 0
    %159 = vmatprep.subr.bf16.mxu0 0
    %160 = vmatpush1.bf16.msra.mxu0 0
    %161 = vmatprep.subr.bf16.mxu0 0
    %162 = vmatpush1.bf16.msra.mxu0 0
    %163 = vmatprep.mubr.bf16.mxu0 0
    %164 = vmatmul.mubr.bf16.gmra.mrb[0].mxu0 %v129
    %v165 = vpop.f32.mrb[0].mxu0
    %v166 = vadd.f32 0.0, %v165
    %v167 = vpop.f32.mrb[0].mxu0
    %v168 = vpop.f32.mrb[0].mxu0
    %v169 = vadd.f32 0.0, %v168
    %v170 = vpop.f32.mrb[0].mxu0
    %171 = vdwg.mxu0
    %v174 = vcombine.high %v166, %v166
    %v176 = vunpack.c.l.s4 1983009808
    %v177 = vunpack.c.0.s8 %v176
    %v178 = vlaneseq
    %v179 = vshrl.u32 %v178, 7
    %v180 = vsub.s32 %v177, %v179
    %v181 = vrot.slane %v166, %v180
    %v183 = vunpack.c.l.s4 1983009808
    %v184 = vunpack.c.0.s8 %v183
    %v185 = vlaneseq
    %v186 = vshrl.u32 %v185, 7
    %v187 = vsub.s32 %v184, %v186
    %v188 = vrot.slane %v174, %v187
    %v189 = vcombine.high %v181, %v181
    %v190 = vcombine.high %v188, %v188
    %v191 = vcombine.high %v169, %v169
    %v193 = vunpack.c.l.s4 1983009808
    %v194 = vunpack.c.0.s8 %v193
    %v195 = vlaneseq
    %v196 = vshrl.u32 %v195, 7
    %v197 = vsub.s32 %v194, %v196
    %v198 = vrot.slane %v169, %v197
    %v200 = vunpack.c.l.s4 1983009808
    %v201 = vunpack.c.0.s8 %v200
    %v202 = vlaneseq
    %v203 = vshrl.u32 %v202, 7
    %v204 = vsub.s32 %v201, %v203
    %v205 = vrot.slane %v191, %v204
    %v206 = vcombine.high %v198, %v198
    %v207 = vcombine.high %v205, %v205
    %216 = vst [vmem:[#allocation3] sm:$0x3] %v181
    %217 = vst [vmem:[#allocation3 + $0x2] sm:$0x3] %v189
    %218 = vst [vmem:[#allocation3 + $0x4] sm:$0x3] %v188
    %219 = vst [vmem:[#allocation3 + $0x6] sm:$0x3] %v190
    %220 = vst [vmem:[#allocation3 + $0x8] sm:$0x3] %v198
    %221 = vst [vmem:[#allocation3 + $0xa] sm:$0x3] %v206
    %222 = vst [vmem:[#allocation3 + $0xc] sm:$0x3] %v205
    %223 = vst [vmem:[#allocation3 + $0xe] sm:$0x3] %v207
    %v224 = vld [vmem:[#allocation2] sm:$0x3]
    %v225 = vmul.f32 %v224, 0.9
    %v226 = vld [vmem:[#allocation3] sm:$0x3]
    %v227 = vadd.f32 %v225, %v226
    %vm228 = vcmp.gt.f32.partialorder %v227, 1.0
    %v229 = vsel %vm228, 1, 0
    %v230 = vcvt.s32.f32 %v229
    %v231 = vpack.c.bf16 %v230, %v230
    %232 = vst [vmem:[#allocation9] sm:$0x1] %v231
    %v233 = vmul.f32 %v227, 0.9
    %v234 = vsel %vm228, %v233, %v227
    %v235 = vmul.f32 %v234, 0.9
    %s236 = scalar_lea.vmem [#allocation3], 2
    %v237 = vld [vmem:[%s236] sm:$0x3]
    %v238 = vadd.f32 %v235, %v237
    %vm239 = vcmp.gt.f32.partialorder %v238, 1.0
    %v240 = vsel %vm239, 1, 0
    %v241 = vcvt.s32.f32 %v240
    %v242 = vpack.c.bf16 %v241, %v241
    %s243 = scalar_lea.vmem [#allocation9], 1
    %244 = vst [vmem:[%s243] sm:$0x1] %v242
    %v245 = vmul.f32 %v238, 0.9
    %v246 = vsel %vm239, %v245, %v238
    %v247 = vmul.f32 %v246, 0.9
    %s248 = scalar_lea.vmem [#allocation3], 4
    %v249 = vld [vmem:[%s248] sm:$0x3]
    %v250 = vadd.f32 %v247, %v249
    %vm251 = vcmp.gt.f32.partialorder %v250, 1.0
    %v252 = vsel %vm251, 1, 0
    %v253 = vcvt.s32.f32 %v252
    %v254 = vpack.c.bf16 %v253, %v253
    %s255 = scalar_lea.vmem [#allocation9], 2
    %256 = vst [vmem:[%s255] sm:$0x1] %v254
    %v257 = vmul.f32 %v250, 0.9
    %v258 = vsel %vm251, %v257, %v250
    %v259 = vmul.f32 %v258, 0.9
    %s260 = scalar_lea.vmem [#allocation3], 6
    %v261 = vld [vmem:[%s260] sm:$0x3]
    %v262 = vadd.f32 %v259, %v261
    %vm263 = vcmp.gt.f32.partialorder %v262, 1.0
    %v264 = vsel %vm263, 1, 0
    %v265 = vcvt.s32.f32 %v264
    %v266 = vpack.c.bf16 %v265, %v265
    %s267 = scalar_lea.vmem [#allocation9], 3
    %268 = vst [vmem:[%s267] sm:$0x1] %v266
    %v269 = vmul.f32 %v262, 0.9
    %v270 = vsel %vm263, %v269, %v262
    %v271 = vmul.f32 %v270, 0.9
    %s272 = scalar_lea.vmem [#allocation3], 8
    %v273 = vld [vmem:[%s272] sm:$0x3]
    %v274 = vadd.f32 %v271, %v273
    %vm275 = vcmp.gt.f32.partialorder %v274, 1.0
    %v276 = vsel %vm275, 1, 0
    %v277 = vcvt.s32.f32 %v276
    %v278 = vpack.c.bf16 %v277, %v277
    %s279 = scalar_lea.vmem [#allocation9], 4
    %280 = vst [vmem:[%s279] sm:$0x1] %v278
    %v281 = vmul.f32 %v274, 0.9
    %v282 = vsel %vm275, %v281, %v274
    %v283 = vmul.f32 %v282, 0.9
    %s284 = scalar_lea.vmem [#allocation3], 10
    %v285 = vld [vmem:[%s284] sm:$0x3]
    %v286 = vadd.f32 %v283, %v285
    %vm287 = vcmp.gt.f32.partialorder %v286, 1.0
    %v288 = vsel %vm287, 1, 0
    %v289 = vcvt.s32.f32 %v288
    %v290 = vpack.c.bf16 %v289, %v289
    %s291 = scalar_lea.vmem [#allocation9], 5
    %292 = vst [vmem:[%s291] sm:$0x1] %v290
    %v293 = vmul.f32 %v286, 0.9
    %v294 = vsel %vm287, %v293, %v286
    %v295 = vmul.f32 %v294, 0.9
    %s296 = scalar_lea.vmem [#allocation3], 12
    %v297 = vld [vmem:[%s296] sm:$0x3]
    %v298 = vadd.f32 %v295, %v297
    %vm299 = vcmp.gt.f32.partialorder %v298, 1.0
    %v300 = vsel %vm299, 1, 0
    %v301 = vcvt.s32.f32 %v300
    %v302 = vpack.c.bf16 %v301, %v301
    %s303 = scalar_lea.vmem [#allocation9], 6
    %304 = vst [vmem:[%s303] sm:$0x1] %v302
    %v305 = vmul.f32 %v298, 0.9
    %v306 = vsel %vm299, %v305, %v298
    %v307 = vmul.f32 %v306, 0.9
    %s308 = scalar_lea.vmem [#allocation3], 14
    %v309 = vld [vmem:[%s308] sm:$0x3]
    %v310 = vadd.f32 %v307, %v309
    %vm311 = vcmp.gt.f32.partialorder %v310, 1.0
    %v312 = vsel %vm311, 1, 0
    %v313 = vcvt.s32.f32 %v312
    %v314 = vpack.c.bf16 %v313, %v313
    %s315 = scalar_lea.vmem [#allocation9], 7
    %316 = vst [vmem:[%s315] sm:$0x1] %v314
    %v317 = vmul.f32 %v310, 0.9
    %v318 = vsel %vm311, %v317, %v310
    %319 = vst [vmem:[#allocation2] sm:$0x3] %v318
    // Predicated region
    $region22: #{tpu_custom_call.1} parent=1 // pred_check
      _
    $region23: #{tpu_custom_call.1} parent=1 // pred_check_branch
      %321 = sbr.rel (0) target = $region25
    $region24: #{tpu_custom_call.1} parent=1 // pred_region
      %s323 = ssub.s32 128, 128
      %324 = vsyncadd [#allocation6], %s323
      %s325 = sshll.u32 [#allocation9], 4
      %s326 = int_to_ptr.vmem [resolvable:$true] %s325
      %331 = dma.vmem_to_hbm [thread:$0]  %s326, 128, %s2, [#allocation6], 16, 16, 1
    $region25: #{tpu_custom_call.1} parent=1 // pred_fallthru
      _
    // Predicated region
    $region26: #{tpu_custom_call.1} parent=1 // pred_check
      _
    $region27: #{tpu_custom_call.1} parent=1 // pred_check_branch
      %333 = sbr.rel (0) target = $region29
    $region28: #{tpu_custom_call.1} parent=1 // pred_region
      %334 = dma.done [#allocation6], 128
    $region29: #{tpu_custom_call.1} parent=1 // pred_fallthru
      _
    %335 = vsyncpa [#allocation5], 1
    %336 = vsyncpa [#allocation8], 1
    %337 = vsyncpa [#allocation6], 1

// kernel: tpu_custom_call.1
$region0: #{tpu_custom_call.1}
  #allocation0 [shape = 'u32[]', space=smem, size = 0x4, offset = 0x4, fixed_abs, tag = 'smem constant byte address 0x4 - core index']
  #allocation1 [shape = 'u32[144,128]{1,0:T(1,128)}', space=vmem, size = 0x12000, scoped, tag = 'internal scratch']
  #allocation2 [shape = 'f32[2,128]{1,0:T(2,128)}', space=vmem, size = 0x400, scoped, tag = 'scratch operand']
  #allocation3 [shape = 'f32[8,2,128]{2,1,0:T(2,128)}', space=vmem, size = 0x2000, scoped, tag = 'scratch operand']
  %s0 = inlined_call_operand.hbm [shape: bf16[8,2,32], index: 0, kind: input, shape index: {}]
  %s1 = inlined_call_operand.hbm [shape: bf16[32,128], index: 1, kind: input, shape index: {}]
  %s2 = inlined_call_operand.hbm [shape: bf16[8,2,128], index: 2, kind: output, shape index: {}]
  %s3 = sld [smem:[#allocation0]]
  $region30: #{tpu_custom_call.1} parent=0
    _
  %s5 = ssub.s32 1, %s3
  %s6 = scalar_select 0, %s5, %s3
  $region1: #{tpu_custom_call.1} parent=0
    #allocation4 [shape = 'u8[4096]{0}', space=vmem, size = 0x1000, scoped, tag = 'input window, operand 0, single buffered']
    #allocation5 [shape = 's32[1]{0}', space=sflag, size = 0x4, scoped, tag = 'scoped memory for tpu_custom_call.1']
    #allocation6 [shape = 's32[1]{0}', space=sflag, size = 0x4, scoped, tag = 'scoped memory for tpu_custom_call.1']
    #allocation7 [shape = 'u8[8192]{0}', space=vmem, size = 0x2000, scoped, tag = 'input window, operand 1, single buffered']
    #allocation8 [shape = 's32[1]{0}', space=sflag, size = 0x4, scoped, tag = 'scoped memory for tpu_custom_call.1']
    #allocation9 [shape = 'u8[4096]{0}', space=vmem, size = 0x1000, scoped, tag = 'output window, operand 0, single buffered']
    %7 = vsyncpa [#allocation5], 0
    %8 = vsyncpa [#allocation8], 0
    %9 = vsyncpa [#allocation6], 0
    // Predicated region
    $region2: #{tpu_custom_call.1} parent=1 // pred_check
      _
    $region3: #{tpu_custom_call.1} parent=1 // pred_check_branch
      %11 = sbr.rel (0) target = $region5
    $region4: #{tpu_custom_call.1} parent=1 // pred_region
      %s13 = ssub.s32 128, 128
      %14 = vsyncadd [#allocation5], %s13
      %s15 = sshll.u32 [#allocation4], 4
      %s16 = int_to_ptr.vmem [resolvable:$true] %s15
      %21 = dma.hbm_to_vmem [thread:$0]  %s0, 128, %s16, [#allocation5], 16, 16, 1
    $region5: #{tpu_custom_call.1} parent=1 // pred_fallthru
      _
    // Predicated region
    $region6: #{tpu_custom_call.1} parent=1 // pred_check
      _
    $region7: #{tpu_custom_call.1} parent=1 // pred_check_branch
      %23 = sbr.rel (0) target = $region9
    $region8: #{tpu_custom_call.1} parent=1 // pred_region
      %s25 = ssub.s32 256, 256
      %26 = vsyncadd [#allocation8], %s25
      %s27 = sshll.u32 [#allocation7], 4
      %s28 = int_to_ptr.vmem [resolvable:$true] %s27
      %33 = dma.hbm_to_vmem [thread:$0]  %s1, 256, %s28, [#allocation8], 64, 64, 4
    $region9: #{tpu_custom_call.1} parent=1 // pred_fallthru
      _
    // Predicated region
    $region10: #{tpu_custom_call.1} parent=1 // pred_check
      _
    $region11: #{tpu_custom_call.1} parent=1 // pred_check_branch
      %35 = sbr.rel (0) target = $region13
    $region12: #{tpu_custom_call.1} parent=1 // pred_region
      %36 = dma.done [#allocation5], 128
    $region13: #{tpu_custom_call.1} parent=1 // pred_fallthru
      _
    // Predicated region
    $region14: #{tpu_custom_call.1} parent=1 // pred_check
      _
    $region15: #{tpu_custom_call.1} parent=1 // pred_check_branch
      %38 = sbr.rel (0) target = $region17
    $region16: #{tpu_custom_call.1} parent=1 // pred_region
      %39 = dma.done [#allocation8], 256
    $region17: #{tpu_custom_call.1} parent=1 // pred_fallthru
      _
    %p41 = scmp.eq.s32.totalorder 0, 0
    // Predicated region
    $region18: #{tpu_custom_call.1} parent=1 // pred_check
      %p42 = pneg %p41
    $region19: #{tpu_custom_call.1} parent=1 // pred_check_branch
      %44 = sbr.rel (%p42) target = $region21
    $region20: #{tpu_custom_call.1} parent=1 // pred_region
      %45 = vst [vmem:[#allocation2] sm:$0x3] 0.0
    $region21: #{tpu_custom_call.1} parent=1 // pred_fallthru
      _
    %v46 = vld [vmem:[#allocation4] sm:$0x1]
    %v47 = vld [vmem:[#allocation4 + $0x1] sm:$0x1]
    %v48 = vld [vmem:[#allocation4 + $0x2] sm:$0x1]
    %v49 = vld [vmem:[#allocation4 + $0x3] sm:$0x1]
    %v50 = vld [vmem:[#allocation4 + $0x4] sm:$0x1]
    %v51 = vld [vmem:[#allocation4 + $0x5] sm:$0x1]
    %v52 = vld [vmem:[#allocation4 + $0x6] sm:$0x1]
    %v53 = vld [vmem:[#allocation4 + $0x7] sm:$0x1]
    %v54 = vld [vmem:[#allocation7] sm:$0xf]
    %v55 = vld [vmem:[#allocation7 + $0x4] sm:$0xf]
    %v56 = vld [vmem:[#allocation7 + $0x8] sm:$0xf]
    %v57 = vld [vmem:[#allocation7 + $0xc] sm:$0xf]
    %v66 = vcombine.low %v46, %v47
    %v67 = vcombine.low %v48, %v49
    %v68 = vcombine.low %v50, %v51
    %v69 = vcombine.low %v52, %v53
    %v71 = vunpack.c.l.s4 1966171168
    %v72 = vunpack.c.0.s8 %v71
    %v73 = vlaneseq
    %v74 = vshrl.u32 %v73, 7
    %v75 = vsub.s32 %v72, %v74
    %v76 = vrot.slane %v66, %v75
    %v78 = vunpack.c.l.s4 1966171168
    %v79 = vunpack.c.0.s8 %v78
    %v80 = vlaneseq
    %v81 = vshrl.u32 %v80, 7
    %v82 = vsub.s32 %v79, %v81
    %v83 = vrot.slane %v67, %v82
    %v85 = vunpack.c.l.s4 1966171168
    %v86 = vunpack.c.0.s8 %v85
    %v87 = vlaneseq
    %v88 = vshrl.u32 %v87, 7
    %v89 = vsub.s32 %v86, %v88
    %v90 = vrot.slane %v68, %v89
    %v92 = vunpack.c.l.s4 1966171168
    %v93 = vunpack.c.0.s8 %v92
    %v94 = vlaneseq
    %v95 = vshrl.u32 %v94, 7
    %v96 = vsub.s32 %v93, %v95
    %v97 = vrot.slane %v69, %v96
    %v98 = vcombine.low %v76, %v83
    %v99 = vcombine.low %v90, %v97
    %v101 = vunpack.c.l.s4 1966171168
    %v102 = vunpack.c.0.s8 %v101
    %v103 = vlaneseq
    %v104 = vshrl.u32 %v103, 7
    %v105 = vsub.s32 %v102, %v104
    %v106 = vrot.slane %v98, %v105
    %v108 = vunpack.c.l.s4 1966171168
    %v109 = vunpack.c.0.s8 %v108
    %v110 = vlaneseq
    %v111 = vshrl.u32 %v110, 7
    %v112 = vsub.s32 %v109, %v111
    %v113 = vrot.slane %v99, %v112
    %v114 = vcombine.low %v106, %v113
    %v119 = vunpack.c.l.b16 %v54
    %v120 = vunpack.c.l.b16 %v55
    %v121 = vunpack.c.l.b16 %v56
    %v122 = vunpack.c.l.b16 %v57
    %v123 = vpack.c.b16 %v120, %v119
    %v124 = vpack.c.b16 %v122, %v121
    %vm127 = vcmask 261120
    %v129 = vsel %vm127, %v114, 0
    %131 = vmatprep.subr.bf16.mxu0 0
    %132 = vmatpush1.bf16.msra.mxu0 %v123
    %133 = vmatprep.subr.bf16.mxu0 0
    %134 = vmatpush1.bf16.msra.mxu0 %v124
    %135 = vmatprep.subr.bf16.mxu0 0
    %136 = vmatpush1.bf16.msra.mxu0 0
    %137 = vmatprep.subr.bf16.mxu0 0
    %138 = vmatpush1.bf16.msra.mxu0 0
    %139 = vmatprep.subr.bf16.mxu0 0
    %140 = vmatpush1.bf16.msra.mxu0 0
    %141 = vmatprep.subr.bf16.mxu0 0
    %142 = vmatpush1.bf16.msra.mxu0 0
    %143 = vmatprep.subr.bf16.mxu0 0
    %144 = vmatpush1.bf16.msra.mxu0 0
    %145 = vmatprep.subr.bf16.mxu0 0
    %146 = vmatpush1.bf16.msra.mxu0 0
    %147 = vmatprep.subr.bf16.mxu0 0
    %148 = vmatpush1.bf16.msra.mxu0 0
    %149 = vmatprep.subr.bf16.mxu0 0
    %150 = vmatpush1.bf16.msra.mxu0 0
    %151 = vmatprep.subr.bf16.mxu0 0
    %152 = vmatpush1.bf16.msra.mxu0 0
    %153 = vmatprep.subr.bf16.mxu0 0
    %154 = vmatpush1.bf16.msra.mxu0 0
    %155 = vmatprep.subr.bf16.mxu0 0
    %156 = vmatpush1.bf16.msra.mxu0 0
    %157 = vmatprep.subr.bf16.mxu0 0
    %158 = vmatpush1.bf16.msra.mxu0 0
    %159 = vmatprep.subr.bf16.mxu0 0
    %160 = vmatpush1.bf16.msra.mxu0 0
    %161 = vmatprep.subr.bf16.mxu0 0
    %162 = vmatpush1.bf16.msra.mxu0 0
    %163 = vmatprep.mubr.bf16.mxu0 0
    %164 = vmatmul.mubr.bf16.gmra.mrb[0].mxu0 %v129
    %v165 = vpop.f32.mrb[0].mxu0
    %v166 = vadd.f32 0.0, %v165
    %v167 = vpop.f32.mrb[0].mxu0
    %v168 = vpop.f32.mrb[0].mxu0
    %v169 = vadd.f32 0.0, %v168
    %v170 = vpop.f32.mrb[0].mxu0
    %171 = vdwg.mxu0
    %v174 = vcombine.high %v166, %v166
    %v176 = vunpack.c.l.s4 1983009808
    %v177 = vunpack.c.0.s8 %v176
    %v178 = vlaneseq
    %v179 = vshrl.u32 %v178, 7
    %v180 = vsub.s32 %v177, %v179
    %v181 = vrot.slane %v166, %v180
    %v183 = vunpack.c.l.s4 1983009808
    %v184 = vunpack.c.0.s8 %v183
    %v185 = vlaneseq
    %v186 = vshrl.u32 %v185, 7
    %v187 = vsub.s32 %v184, %v186
    %v188 = vrot.slane %v174, %v187
    %v189 = vcombine.high %v181, %v181
    %v190 = vcombine.high %v188, %v188
    %v191 = vcombine.high %v169, %v169
    %v193 = vunpack.c.l.s4 1983009808
    %v194 = vunpack.c.0.s8 %v193
    %v195 = vlaneseq
    %v196 = vshrl.u32 %v195, 7
    %v197 = vsub.s32 %v194, %v196
    %v198 = vrot.slane %v169, %v197
    %v200 = vunpack.c.l.s4 1983009808
    %v201 = vunpack.c.0.s8 %v200
    %v202 = vlaneseq
    %v203 = vshrl.u32 %v202, 7
    %v204 = vsub.s32 %v201, %v203
    %v205 = vrot.slane %v191, %v204
    %v206 = vcombine.high %v198, %v198
    %v207 = vcombine.high %v205, %v205
    %216 = vst [vmem:[#allocation3] sm:$0x3] %v181
    %217 = vst [vmem:[#allocation3 + $0x2] sm:$0x3] %v189
    %218 = vst [vmem:[#allocation3 + $0x4] sm:$0x3] %v188
    %219 = vst [vmem:[#allocation3 + $0x6] sm:$0x3] %v190
    %220 = vst [vmem:[#allocation3 + $0x8] sm:$0x3] %v198
    %221 = vst [vmem:[#allocation3 + $0xa] sm:$0x3] %v206
    %222 = vst [vmem:[#allocation3 + $0xc] sm:$0x3] %v205
    %223 = vst [vmem:[#allocation3 + $0xe] sm:$0x3] %v207
    %v224 = vld [vmem:[#allocation2] sm:$0x3]
    %v225 = vmul.f32 %v224, 0.9
    %v226 = vld [vmem:[#allocation3] sm:$0x3]
    %v227 = vadd.f32 %v225, %v226
    %vm228 = vcmp.gt.f32.partialorder %v227, 1.0
    %v229 = vsel %vm228, 1, 0
    %v230 = vcvt.s32.f32 %v229
    %v231 = vpack.c.bf16 %v230, %v230
    %232 = vst [vmem:[#allocation9] sm:$0x1] %v231
    %v233 = vmul.f32 %v227, 0.9
    %v234 = vsel %vm228, %v233, %v227
    %v235 = vmul.f32 %v234, 0.9
    %s236 = scalar_lea.vmem [#allocation3], 2
    %v237 = vld [vmem:[%s236] sm:$0x3]
    %v238 = vadd.f32 %v235, %v237
    %vm239 = vcmp.gt.f32.partialorder %v238, 1.0
    %v240 = vsel %vm239, 1, 0
    %v241 = vcvt.s32.f32 %v240
    %v242 = vpack.c.bf16 %v241, %v241
    %s243 = scalar_lea.vmem [#allocation9], 1
    %244 = vst [vmem:[%s243] sm:$0x1] %v242
    %v245 = vmul.f32 %v238, 0.9
    %v246 = vsel %vm239, %v245, %v238
    %v247 = vmul.f32 %v246, 0.9
    %s248 = scalar_lea.vmem [#allocation3], 4
    %v249 = vld [vmem:[%s248] sm:$0x3]
    %v250 = vadd.f32 %v247, %v249
    %vm251 = vcmp.gt.f32.partialorder %v250, 1.0
    %v252 = vsel %vm251, 1, 0
    %v253 = vcvt.s32.f32 %v252
    %v254 = vpack.c.bf16 %v253, %v253
    %s255 = scalar_lea.vmem [#allocation9], 2
    %256 = vst [vmem:[%s255] sm:$0x1] %v254
    %v257 = vmul.f32 %v250, 0.9
    %v258 = vsel %vm251, %v257, %v250
    %v259 = vmul.f32 %v258, 0.9
    %s260 = scalar_lea.vmem [#allocation3], 6
    %v261 = vld [vmem:[%s260] sm:$0x3]
    %v262 = vadd.f32 %v259, %v261
    %vm263 = vcmp.gt.f32.partialorder %v262, 1.0
    %v264 = vsel %vm263, 1, 0
    %v265 = vcvt.s32.f32 %v264
    %v266 = vpack.c.bf16 %v265, %v265
    %s267 = scalar_lea.vmem [#allocation9], 3
    %268 = vst [vmem:[%s267] sm:$0x1] %v266
    %v269 = vmul.f32 %v262, 0.9
    %v270 = vsel %vm263, %v269, %v262
    %v271 = vmul.f32 %v270, 0.9
    %s272 = scalar_lea.vmem [#allocation3], 8
    %v273 = vld [vmem:[%s272] sm:$0x3]
    %v274 = vadd.f32 %v271, %v273
    %vm275 = vcmp.gt.f32.partialorder %v274, 1.0
    %v276 = vsel %vm275, 1, 0
    %v277 = vcvt.s32.f32 %v276
    %v278 = vpack.c.bf16 %v277, %v277
    %s279 = scalar_lea.vmem [#allocation9], 4
    %280 = vst [vmem:[%s279] sm:$0x1] %v278
    %v281 = vmul.f32 %v274, 0.9
    %v282 = vsel %vm275, %v281, %v274
    %v283 = vmul.f32 %v282, 0.9
    %s284 = scalar_lea.vmem [#allocation3], 10
    %v285 = vld [vmem:[%s284] sm:$0x3]
    %v286 = vadd.f32 %v283, %v285
    %vm287 = vcmp.gt.f32.partialorder %v286, 1.0
    %v288 = vsel %vm287, 1, 0
    %v289 = vcvt.s32.f32 %v288
    %v290 = vpack.c.bf16 %v289, %v289
    %s291 = scalar_lea.vmem [#allocation9], 5
    %292 = vst [vmem:[%s291] sm:$0x1] %v290
    %v293 = vmul.f32 %v286, 0.9
    %v294 = vsel %vm287, %v293, %v286
    %v295 = vmul.f32 %v294, 0.9
    %s296 = scalar_lea.vmem [#allocation3], 12
    %v297 = vld [vmem:[%s296] sm:$0x3]
    %v298 = vadd.f32 %v295, %v297
    %vm299 = vcmp.gt.f32.partialorder %v298, 1.0
    %v300 = vsel %vm299, 1, 0
    %v301 = vcvt.s32.f32 %v300
    %v302 = vpack.c.bf16 %v301, %v301
    %s303 = scalar_lea.vmem [#allocation9], 6
    %304 = vst [vmem:[%s303] sm:$0x1] %v302
    %v305 = vmul.f32 %v298, 0.9
    %v306 = vsel %vm299, %v305, %v298
    %v307 = vmul.f32 %v306, 0.9
    %s308 = scalar_lea.vmem [#allocation3], 14
    %v309 = vld [vmem:[%s308] sm:$0x3]
    %v310 = vadd.f32 %v307, %v309
    %vm311 = vcmp.gt.f32.partialorder %v310, 1.0
    %v312 = vsel %vm311, 1, 0
    %v313 = vcvt.s32.f32 %v312
    %v314 = vpack.c.bf16 %v313, %v313
    %s315 = scalar_lea.vmem [#allocation9], 7
    %316 = vst [vmem:[%s315] sm:$0x1] %v314
    %v317 = vmul.f32 %v310, 0.9
    %v318 = vsel %vm311, %v317, %v310
    %319 = vst [vmem:[#allocation2] sm:$0x3] %v318
    // Predicated region
    $region22: #{tpu_custom_call.1} parent=1 // pred_check
      _
    $region23: #{tpu_custom_call.1} parent=1 // pred_check_branch
      %321 = sbr.rel (0) target = $region25
    $region24: #{tpu_custom_call.1} parent=1 // pred_region
      %s323 = ssub.s32 128, 128
      %324 = vsyncadd [#allocation6], %s323
      %s325 = sshll.u32 [#allocation9], 4
      %s326 = int_to_ptr.vmem [resolvable:$true] %s325
      %331 = dma.vmem_to_hbm [thread:$0]  %s326, 128, %s2, [#allocation6], 16, 16, 1
    $region25: #{tpu_custom_call.1} parent=1 // pred_fallthru
      _
    // Predicated region
    $region26: #{tpu_custom_call.1} parent=1 // pred_check
      _
    $region27: #{tpu_custom_call.1} parent=1 // pred_check_branch
      %333 = sbr.rel (0) target = $region29
    $region28: #{tpu_custom_call.1} parent=1 // pred_region
      %334 = dma.done [#allocation6], 128
    $region29: #{tpu_custom_call.1} parent=1 // pred_fallthru
      _
    %335 = vsyncpa [#allocation5], 1
    %336 = vsyncpa [#allocation8], 1
    %337 = vsyncpa [#allocation6], 1

</llo_original>
